<compile_context>
chip_gen: v6e
topology: v6e:2x2x1
jax: 0.10.0
libtpu: 0.0.40
codegen_flags: <defaults>
</compile_context>

<pallas_src>
import functools

import jax
import jax.numpy as jnp
from jax.experimental import pallas as pl
from jax.experimental.pallas import tpu as pltpu


def _final_layer_kernel(x_ref, mod_ref, w_ref, b_ref, o_ref):
    # x_ref:   (1, TN, H)        activations for this (batch, token-tile)
    # mod_ref: (1, 2, H)         row 0 = shift, row 1 = (1 + scale), f32
    # w_ref:   (H, OUT_pad)      final linear weight, pre-transposed, bf16
    # b_ref:   (1, OUT_pad)      final linear bias (zero padded), f32
    # o_ref:   (1, TN, OUT_pad)
    xf = x_ref[0].astype(jnp.float32)                          # (TN, H)
    h = xf.shape[-1]
    inv_h = 1.0 / h

    # LayerNorm (eps=1e-6, no affine) with fused single-pass statistics:
    # var = E[x^2] - mean^2  (one read of the tile feeds both reductions).
    mean = jnp.sum(xf, axis=-1, keepdims=True) * inv_h         # (TN, 1)
    ex2 = jnp.sum(xf * xf, axis=-1, keepdims=True) * inv_h     # (TN, 1)
    var = jnp.maximum(ex2 - mean * mean, 0.0)
    inv_std = jax.lax.rsqrt(var + 1e-6)                        # (TN, 1)

    mod = mod_ref[0].astype(jnp.float32)                       # (2, H)
    shift = mod[0]                                             # (H,)
    scale1 = mod[1]                                            # (H,) == 1+scale

    # normalize + modulate
    xm = (xf - mean) * inv_std * scale1[None, :] + shift[None, :]   # (TN, H)

    # Final Linear on the MXU: bf16 x bf16 -> f32 accumulate (native path).
    out = jnp.dot(xm.astype(jnp.bfloat16), w_ref[...],
                  preferred_element_type=jnp.float32)          # (TN, OUT_pad)
    out = out + b_ref[...]                                     # broadcast bias

    o_ref[0] = out.astype(o_ref.dtype)


def _pick_token_tile(n, dtype):
    """Largest tile <= 512 that divides N and satisfies the sublane rule."""
    sub = 16 if dtype == jnp.bfloat16 else 8
    for cand in (512, 256, 128, 64, 32, 16, 8):
        if cand <= n and n % cand == 0 and cand % sub == 0:
            return cand
    return n  # full-sequence block is always a legal block shape


@functools.partial(jax.jit, static_argnames=("token_tile", "vmem_limit_bytes"))
def final_layer(x, c, w_ada, b_ada, w_lin, b_lin,
                token_tile=None, vmem_limit_bytes=None):
    """PixArt FinalLayer forward.

    x:     (B, N, H)   tokens
    c:     (B, H)      conditioning
    w_ada: (2H, H), b_ada: (2H,)    adaLN_modulation[1] (Linear after SiLU)
    w_lin: (OUT, H), b_lin: (OUT,)  final Linear, OUT = patch**2 * out_ch
    returns (B, N, OUT)
    """
    B, N, H = x.shape
    OUT = w_lin.shape[0]

    # ---- adaLN modulation: tiny (B, 2H) op, hoisted out of the Pallas grid.
    mod = (jax.nn.silu(c.astype(jnp.float32))
           @ w_ada.T.astype(jnp.float32)
           + b_ada.astype(jnp.float32))                       # (B, 2H)
    shift, scale = mod[:, :H], mod[:, H:]
    mod2 = jnp.stack([shift, 1.0 + scale], axis=1)            # (B, 2, H) f32

    # ---- token tiling (sublane-aligned, VMEM-safe on v5e/v6e/v7x).
    sub = 16 if x.dtype == jnp.bfloat16 else 8
    tn = _pick_token_tile(N, x.dtype) if token_tile is None else token_tile
    assert N % tn == 0, "token_tile must divide N"
    assert tn == N or tn % sub == 0, (
        f"token_tile must be a multiple of {sub} for dtype {x.dtype}")

    # ---- lane-dense output: zero-pad OUT up to a multiple of 128.
    OUT_pad = ((OUT + 127) // 128) * 128
    w_t = jnp.zeros((H, OUT_pad), jnp.bfloat16)
    w_t = w_t.at[:, :OUT].set(w_lin.T.astype(jnp.bfloat16))   # (H, OUT_pad) bf16
    b_pad = jnp.zeros((1, OUT_pad), jnp.float32)
    b_pad = b_pad.at[0, :OUT].set(b_lin.astype(jnp.float32))  # (1, OUT_pad)

    grid = (B, N // tn)   # both axes data-parallel (megacore-shardable)
    out = pl.pallas_call(
        _final_layer_kernel,
        out_shape=jax.ShapeDtypeStruct((B, N, OUT_pad), x.dtype),
        grid_spec=pltpu.PrefetchScalarGridSpec(
            num_scalar_prefetch=0,
            grid=grid,
            in_specs=[
                pl.BlockSpec((1, tn, H), lambda bi, ni: (bi, ni, 0)),    # x
                pl.BlockSpec((1, 2, H), lambda bi, ni: (bi, 0, 0)),      # mod
                pl.BlockSpec((H, OUT_pad), lambda bi, ni: (0, 0)),       # W^T
                pl.BlockSpec((1, OUT_pad), lambda bi, ni: (0, 0)),       # bias
            ],
            out_specs=pl.BlockSpec((1, tn, OUT_pad),
                                   lambda bi, ni: (bi, ni, 0)),
        ),
        compiler_params=pltpu.CompilerParams(
            dimension_semantics=("parallel", "parallel"),
            vmem_limit_bytes=vmem_limit_bytes),
    )(x, mod2, w_t, b_pad)

    return out if OUT_pad == OUT else out[..., :OUT]


def final_layer_ref(x, c, w_ada, b_ada, w_lin, b_lin):
    """Pure-JAX reference mirroring the PyTorch forward (f32)."""
    mod = jax.nn.silu(c) @ w_ada.T + b_ada                    # (B, 2H)
    H = x.shape[-1]
    shift, scale = mod[:, :H], mod[:, H:]
    mean = jnp.mean(x, axis=-1, keepdims=True)
    var = jnp.mean((x - mean) ** 2, axis=-1, keepdims=True)
    xn = (x - mean) * jax.lax.rsqrt(var + 1e-6)
    xm = xn * (1.0 + scale[:, None, :]) + shift[:, None, :]
    return jnp.einsum("bnh,oh->bno", xm, w_lin) + b_lin


if __name__ == "__main__":
    # Small shapes consistent with the module.
    B, N, H = 2, 8, 32                      # batch, tokens, hidden_size
    patch_size, out_channels = 2, 4
    OUT = patch_size * patch_size * out_channels   # 16

    key = jax.random.PRNGKey(0)
    kx, kc, kwa, kba, kwl, kbl = jax.random.split(key, 6)

    x = jax.random.normal(kx, (B, N, H), dtype=jnp.float32)
    c = jax.random.normal(kc, (B, H), dtype=jnp.float32)
    # adaLN_modulation: SiLU -> Linear(H, 2H)
    w_ada = jax.random.normal(kwa, (2 * H, H), dtype=jnp.float32) * 0.02
    b_ada = jax.random.normal(kba, (2 * H,), dtype=jnp.float32) * 0.02
    # final Linear(H, OUT)
    w_lin = jax.random.normal(kwl, (OUT, H), dtype=jnp.float32) * 0.02
    b_lin = jax.random.normal(kbl, (OUT,), dtype=jnp.float32) * 0.02

    out = final_layer(x, c, w_ada, b_ada, w_lin, b_lin)
    out = jax.block_until_ready(out)

    ref = final_layer_ref(x, c, w_ada, b_ada, w_lin, b_lin)
    assert out.shape == (B, N, OUT)
    # bf16 MXU operands (f32 accumulation) -> loosen tolerance vs f32 reference.
    assert jnp.allclose(out, ref, atol=1e-2, rtol=1e-2), "mismatch vs reference"

    print("KERNEL_OK")
</pallas_src>

<mosaic_0001>
module attributes {stable_mosaic.version = 11 : i64} {
  func.func @_final_layer_kernel(%arg0: i32, %arg1: i32, %arg2: memref<1x8x32xf32, #tpu.memory_space<vmem>>, %arg3: memref<1x2x32xf32, #tpu.memory_space<vmem>>, %arg4: memref<32x128xbf16, #tpu.memory_space<vmem>>, %arg5: memref<1x128xf32, #tpu.memory_space<vmem>>, %arg6: memref<1x8x128xf32, #tpu.memory_space<vmem>>) attributes {dimension_semantics = [#tpu.dimension_semantics<parallel>, #tpu.dimension_semantics<parallel>], iteration_bounds = array<i64: 2, 1>, scalar_prefetch = 0 : i64, scratch_operands = 0 : i64, tpu.core_type = #tpu.core_type<tc>, window_params = [{transform_indices = @transform_0, window_bounds = array<i64: 1, 8, 32>}, {transform_indices = @transform_1, window_bounds = array<i64: 1, 2, 32>}, {pipeline_mode = #tpu.pipeline_mode<synchronous>, transform_indices = @transform_2, window_bounds = array<i64: 32, 128>}, {pipeline_mode = #tpu.pipeline_mode<synchronous>, transform_indices = @transform_3, window_bounds = array<i64: 1, 128>}, {transform_indices = @transform_4, window_bounds = array<i64: 1, 8, 128>}]} {
    %c0 = arith.constant 0 : index
    %c0_0 = arith.constant 0 : index
    %c0_1 = arith.constant 0 : index
    %0 = vector.load %arg2[%c0, %c0_0, %c0_1] : memref<1x8x32xf32, #tpu.memory_space<vmem>>, vector<1x8x32xf32>
    %1 = vector.shape_cast %0 : vector<1x8x32xf32> to vector<8x32xf32>
    %cst = arith.constant dense<0.000000e+00> : vector<8xf32>
    %2 = vector.multi_reduction <add>, %1, %cst [1] : vector<8x32xf32> to vector<8xf32>
    %3 = vector.shape_cast %2 : vector<8xf32> to vector<8x1xf32>
    %cst_2 = arith.constant 3.125000e-02 : f32
    %4 = vector.broadcast %cst_2 : f32 to vector<8x1xf32>
    %5 = arith.mulf %3, %4 : vector<8x1xf32>
    %6 = arith.mulf %1, %1 : vector<8x32xf32>
    %cst_3 = arith.constant dense<0.000000e+00> : vector<8xf32>
    %7 = vector.multi_reduction <add>, %6, %cst_3 [1] : vector<8x32xf32> to vector<8xf32>
    %8 = vector.shape_cast %7 : vector<8xf32> to vector<8x1xf32>
    %cst_4 = arith.constant 3.125000e-02 : f32
    %9 = vector.broadcast %cst_4 : f32 to vector<8x1xf32>
    %10 = arith.mulf %8, %9 : vector<8x1xf32>
    %11 = arith.mulf %5, %5 : vector<8x1xf32>
    %12 = arith.subf %10, %11 : vector<8x1xf32>
    %cst_5 = arith.constant 0.000000e+00 : f32
    %13 = vector.broadcast %cst_5 : f32 to vector<8x1xf32>
    %14 = arith.maximumf %12, %13 : vector<8x1xf32>
    %cst_6 = arith.constant 9.99999997E-7 : f32
    %15 = vector.broadcast %cst_6 : f32 to vector<8x1xf32>
    %16 = arith.addf %14, %15 : vector<8x1xf32>
    %17 = math.rsqrt %16 : vector<8x1xf32>
    %c0_7 = arith.constant 0 : index
    %c0_8 = arith.constant 0 : index
    %c0_9 = arith.constant 0 : index
    %18 = vector.load %arg3[%c0_7, %c0_8, %c0_9] : memref<1x2x32xf32, #tpu.memory_space<vmem>>, vector<1x2x32xf32>
    %19 = vector.shape_cast %18 : vector<1x2x32xf32> to vector<2x32xf32>
    %20 = vector.extract_strided_slice %19 {offsets = [0, 0], sizes = [1, 32], strides = [1, 1]} : vector<2x32xf32> to vector<1x32xf32>
    %21 = vector.shape_cast %20 : vector<1x32xf32> to vector<32xf32>
    %22 = vector.extract_strided_slice %19 {offsets = [1, 0], sizes = [1, 32], strides = [1, 1]} : vector<2x32xf32> to vector<1x32xf32>
    %23 = vector.shape_cast %22 : vector<1x32xf32> to vector<32xf32>
    %24 = vector.broadcast %5 : vector<8x1xf32> to vector<8x32xf32>
    %25 = arith.subf %1, %24 : vector<8x32xf32>
    %26 = vector.broadcast %17 : vector<8x1xf32> to vector<8x32xf32>
    %27 = arith.mulf %25, %26 : vector<8x32xf32>
    %28 = vector.shape_cast %23 : vector<32xf32> to vector<1x32xf32>
    %29 = vector.broadcast %28 : vector<1x32xf32> to vector<8x32xf32>
    %30 = arith.mulf %27, %29 : vector<8x32xf32>
    %31 = vector.shape_cast %21 : vector<32xf32> to vector<1x32xf32>
    %32 = vector.broadcast %31 : vector<1x32xf32> to vector<8x32xf32>
    %33 = arith.addf %30, %32 : vector<8x32xf32>
    %34 = arith.truncf %33 : vector<8x32xf32> to vector<8x32xbf16>
    %c0_10 = arith.constant 0 : index
    %c0_11 = arith.constant 0 : index
    %35 = vector.load %arg4[%c0_10, %c0_11] : memref<32x128xbf16, #tpu.memory_space<vmem>>, vector<32x128xbf16>
    %cst_12 = arith.constant dense<0.000000e+00> : vector<8x128xf32>
    %36 = tpu.matmul %34, %35, %cst_12 {dimension_numbers = #tpu.dot_dimension_numbers<[1], [0], [0], [1], [0, 0, 1, 1], [], []>} : vector<8x32xbf16>, vector<32x128xbf16>, vector<8x128xf32> -> vector<8x128xf32>
    %c0_13 = arith.constant 0 : index
    %c0_14 = arith.constant 0 : index
    %37 = vector.load %arg5[%c0_13, %c0_14] : memref<1x128xf32, #tpu.memory_space<vmem>>, vector<1x128xf32>
    %38 = vector.broadcast %37 : vector<1x128xf32> to vector<8x128xf32>
    %39 = arith.addf %36, %38 : vector<8x128xf32>
    %c0_15 = arith.constant 0 : index
    %c0_16 = arith.constant 0 : index
    %c0_17 = arith.constant 0 : index
    %40 = vector.load %arg6[%c0_15, %c0_16, %c0_17] : memref<1x8x128xf32, #tpu.memory_space<vmem>>, vector<1x8x128xf32>
    %41 = vector.shape_cast %40 : vector<1x8x128xf32> to vector<8x128xf32>
    %42 = vector.shape_cast %39 : vector<8x128xf32> to vector<1x8x128xf32>
    tpu.vector_store %arg6[%c0_15, %c0_16, %c0_17], %42 {strides = array<i32>} : memref<1x8x128xf32, #tpu.memory_space<vmem>>, vector<1x8x128xf32>,
    return
  }
  func.func @transform_0(%arg0: i32, %arg1: i32) -> (i32, i32, i32) {
    %c0_i32 = arith.constant 0 : i32
    %c0_i32_0 = arith.constant 0 : i32
    return %arg0, %arg1, %c0_i32 : i32, i32, i32
  }
  func.func @transform_1(%arg0: i32, %arg1: i32) -> (i32, i32, i32) {
    %c0_i32 = arith.constant 0 : i32
    %c0_i32_0 = arith.constant 0 : i32
    %c0_i32_1 = arith.constant 0 : i32
    return %arg0, %c0_i32, %c0_i32_0 : i32, i32, i32
  }
  func.func @transform_2(%arg0: i32, %arg1: i32) -> (i32, i32) {
    %c0_i32 = arith.constant 0 : i32
    %c0_i32_0 = arith.constant 0 : i32
    %c0_i32_1 = arith.constant 0 : i32
    return %c0_i32, %c0_i32_0 : i32, i32
  }
  func.func @transform_3(%arg0: i32, %arg1: i32) -> (i32, i32) {
    %c0_i32 = arith.constant 0 : i32
    %c0_i32_0 = arith.constant 0 : i32
    %c0_i32_1 = arith.constant 0 : i32
    return %c0_i32, %c0_i32_0 : i32, i32
  }
  func.func @transform_4(%arg0: i32, %arg1: i32) -> (i32, i32, i32) {
    %c0_i32 = arith.constant 0 : i32
    %c0_i32_0 = arith.constant 0 : i32
    return %arg0, %arg1, %c0_i32 : i32, i32, i32
  }
}

</mosaic_0001>

<llo_original>
// kernel: final_layer.1
$region0: #{final_layer.1}
  #allocation0 [shape = 'u32[]', space=smem, size = 0x4, offset = 0x4, fixed_abs, tag = 'smem constant byte address 0x4 - core index']
  #allocation1 [shape = 'u32[144,128]{1,0:T(1,128)}', space=vmem, size = 0x12000, scoped, tag = 'internal scratch']
  %s0 = inlined_call_operand.vmem [shape: f32[2,8,32], index: 0, kind: input, shape index: {}]
  %s1 = inlined_call_operand.vmem [shape: f32[2,2,32], index: 1, kind: input, shape index: {}]
  %s2 = inlined_call_operand.vmem [shape: bf16[32,128], index: 2, kind: input, shape index: {}]
  %s3 = inlined_call_operand.vmem [shape: f32[1,128], index: 3, kind: input, shape index: {}]
  %s4 = inlined_call_operand.hbm [shape: f32[2,8,128], index: 4, kind: output, shape index: {}]
  %s5 = sld [smem:[#allocation0]]
  $region49: #{final_layer.1} parent=0
    _
  %s7 = ssub.s32 1, %s5
  %s8 = scalar_select 0, %s7, %s5
  $region1: #{final_layer.1} parent=0
    #allocation2 [shape = 'u8[8192]{0}', space=vmem, size = 0x2000, scoped, tag = 'output window, operand 0']
    #allocation3 [shape = 's32[2]{0}', space=sflag, size = 0x8, scoped, tag = 'scoped memory for final_layer.1']
    %9 = vsyncpa [#allocation3], 0
    %s10 = scalar_lea.sflag [#allocation3], 1
    %11 = vsyncpa %s10, 0
    loop: start=0, step=1, limit=4
    $region2: #{final_layer.1} parent=1 // loop_pre_header
      _
    $region3: #{final_layer.1} parent=1 // loop_header
      %s13 = sphi 0, %s17
      %p14 = scmp.ge.s32.totalorder %s13, 4
      %s20 = sphi 0, %s32
      %s21 = sphi 0, %s28
      %s22 = sphi 0, %s20
      %s23 = sphi 0, %s21
      %s24 = sphi 0, %s22
      %s25 = sphi 0, %s23
      %s37 = sphi 0, %s39
      %s40 = sphi 0, %s37
      %s41 = sphi 0, %s40
      %s57 = sphi 0, %s41
      %s63 = sphi 0, %s65
      %s66 = sphi 0, %s63
      %s67 = sphi 0, %s66
      %s83 = sphi 0, %s67
      %s87 = sphi 0, %s87
      %s89 = sphi 0, %s87
      %s90 = sphi 0, %s89
      %s104 = sphi 0, %s90
      %s108 = sphi 0, %s108
      %s110 = sphi 0, %s108
      %s111 = sphi 0, %s110
      %s125 = sphi 0, %s111
      %s133 = sphi 0, %s135
      %s136 = sphi 0, %s133
      %s137 = sphi 0, %s136
      %s153 = sphi 0, %s137
    $region4: #{final_layer.1} parent=1 // loop_header_branch
      %16 = sbr.rel (%p14) target = $region8
    $region5: #{final_layer.1} parent=1 // loop_body
      %s18 = ssub.s32 %s13, 1
      %s19 = ssub.s32 %s13, 2
      %s26 = sadd.s32 1, %s21
      %p27 = scmp.ge.s32.totalorder %s26, 1
      %s28 = scalar_select %p27, 0, %s26
      %s29 = sadd.s32 1, %s20
      %s30 = scalar_select %p27, %s29, %s20
      %p31 = scmp.ge.s32.totalorder %s30, 2
      %s32 = scalar_select %p31, 0, %s30
      %s33 = ssub.s32 %s20, %s32
      %s34 = ssub.s32 %s21, %s28
      %s35 = sor.u32 %s33, %s34
      %p36 = scmp.eq.s32.totalorder %s35, 0
      %s38 = sadd.s32 %s37, 1
      %s39 = scalar_select %p36, %s37, %s38
      %p42 = pneg %p36
      %p43 = scmp.eq.s32.totalorder %s13, 1
      %p44 = por %p42, %p43
      %p45 = scmp.ne.s32.totalorder %s37, %s40
      %p46 = scmp.eq.s32.totalorder %s13, 0
      %p47 = por %p45, %p46
      %p48 = scmp.ne.s32.totalorder %s37, %s40
      %p49 = scmp.eq.s32.totalorder %s18, 1
      %p50 = por %p48, %p49
      %p51 = scmp.ne.s32.totalorder %s40, %s41
      %p52 = scmp.eq.s32.totalorder %s18, 0
      %p53 = por %p51, %p52
      %p54 = scmp.ne.s32.totalorder %s40, %s41
      %p55 = scmp.eq.s32.totalorder %s19, 1
      %p56 = por %p54, %p55
      %p58 = scmp.ne.s32.totalorder %s41, %s57
      %p59 = scmp.eq.s32.totalorder %s19, 0
      %p60 = por %p58, %p59
      %s61 = ssub.s32 %s20, %s32
      %p62 = scmp.eq.s32.totalorder %s61, 0
      %s64 = sadd.s32 %s63, 1
      %s65 = scalar_select %p62, %s63, %s64
      %p68 = pneg %p62
      %p69 = scmp.eq.s32.totalorder %s13, 1
      %p70 = por %p68, %p69
      %p71 = scmp.ne.s32.totalorder %s63, %s66
      %p72 = scmp.eq.s32.totalorder %s13, 0
      %p73 = por %p71, %p72
      %p74 = scmp.ne.s32.totalorder %s63, %s66
      %p75 = scmp.eq.s32.totalorder %s18, 1
      %p76 = por %p74, %p75
      %p77 = scmp.ne.s32.totalorder %s66, %s67
      %p78 = scmp.eq.s32.totalorder %s18, 0
      %p79 = por %p77, %p78
      %p80 = scmp.ne.s32.totalorder %s66, %s67
      %p81 = scmp.eq.s32.totalorder %s19, 1
      %p82 = por %p80, %p81
      %p84 = scmp.ne.s32.totalorder %s67, %s83
      %p85 = scmp.eq.s32.totalorder %s19, 0
      %p86 = por %p84, %p85
      %s88 = sadd.s32 %s87, 1
      %p91 = scmp.eq.s32.totalorder %s13, 1
      %p92 = scmp.ne.s32.totalorder %s87, %s89
      %p93 = scmp.eq.s32.totalorder %s13, 0
      %p94 = por %p92, %p93
      %p95 = scmp.ne.s32.totalorder %s87, %s89
      %p96 = scmp.eq.s32.totalorder %s18, 1
      %p97 = por %p95, %p96
      %p98 = scmp.ne.s32.totalorder %s89, %s90
      %p99 = scmp.eq.s32.totalorder %s18, 0
      %p100 = por %p98, %p99
      %p101 = scmp.ne.s32.totalorder %s89, %s90
      %p102 = scmp.eq.s32.totalorder %s19, 1
      %p103 = por %p101, %p102
      %p105 = scmp.ne.s32.totalorder %s90, %s104
      %p106 = scmp.eq.s32.totalorder %s19, 0
      %p107 = por %p105, %p106
      %s109 = sadd.s32 %s108, 1
      %p112 = scmp.eq.s32.totalorder %s13, 1
      %p113 = scmp.ne.s32.totalorder %s108, %s110
      %p114 = scmp.eq.s32.totalorder %s13, 0
      %p115 = por %p113, %p114
      %p116 = scmp.ne.s32.totalorder %s108, %s110
      %p117 = scmp.eq.s32.totalorder %s18, 1
      %p118 = por %p116, %p117
      %p119 = scmp.ne.s32.totalorder %s110, %s111
      %p120 = scmp.eq.s32.totalorder %s18, 0
      %p121 = por %p119, %p120
      %p122 = scmp.ne.s32.totalorder %s110, %s111
      %p123 = scmp.eq.s32.totalorder %s19, 1
      %p124 = por %p122, %p123
      %p126 = scmp.ne.s32.totalorder %s111, %s125
      %p127 = scmp.eq.s32.totalorder %s19, 0
      %p128 = por %p126, %p127
      %s129 = ssub.s32 %s20, %s32
      %s130 = ssub.s32 %s21, %s28
      %s131 = sor.u32 %s129, %s130
      %p132 = scmp.eq.s32.totalorder %s131, 0
      %s134 = sadd.s32 %s133, 1
      %s135 = scalar_select %p132, %s133, %s134
      %p138 = pneg %p132
      %p139 = scmp.eq.s32.totalorder %s13, 1
      %p140 = por %p138, %p139
      %p141 = scmp.ne.s32.totalorder %s133, %s136
      %p142 = scmp.eq.s32.totalorder %s13, 0
      %p143 = por %p141, %p142
      %p144 = scmp.ne.s32.totalorder %s133, %s136
      %p145 = scmp.eq.s32.totalorder %s18, 1
      %p146 = por %p144, %p145
      %p147 = scmp.ne.s32.totalorder %s136, %s137
      %p148 = scmp.eq.s32.totalorder %s18, 0
      %p149 = por %p147, %p148
      %p150 = scmp.ne.s32.totalorder %s136, %s137
      %p151 = scmp.eq.s32.totalorder %s19, 1
      %p152 = por %p150, %p151
      %p154 = scmp.ne.s32.totalorder %s137, %s153
      %p155 = scmp.eq.s32.totalorder %s19, 0
      %p156 = por %p154, %p155
      %p157 = scmp.le.s32.totalorder 1, %s13
      %p158 = scmp.lt.s32.totalorder %s13, 3
      %p159 = pnand %p157, %p158
      %p160 = pneg %p159
      // Predicated region
      $region9: #{final_layer.1} parent=5 // pred_check
        _
      $region10: #{final_layer.1} parent=5 // pred_check_branch
        %162 = sbr.rel (%p159) target = $region12
      $region11: #{final_layer.1} parent=5 // pred_region
        %s163 = ssub.s32 %s13, 1
        // Predicated region
        $region13: #{final_layer.1} parent=11 // pred_check
          %p164 = pneg %p100
        $region14: #{final_layer.1} parent=11 // pred_check_branch
          %166 = sbr.rel (%p164) target = $region16
        $region15: #{final_layer.1} parent=11 // pred_region
          _
        $region16: #{final_layer.1} parent=11 // pred_fallthru
          _
        // Predicated region
        $region17: #{final_layer.1} parent=11 // pred_check
          %p167 = pneg %p121
        $region18: #{final_layer.1} parent=11 // pred_check_branch
          %169 = sbr.rel (%p167) target = $region20
        $region19: #{final_layer.1} parent=11 // pred_region
          _
        $region20: #{final_layer.1} parent=11 // pred_fallthru
          _
      $region12: #{final_layer.1} parent=5 // pred_fallthru
        _
      %p170 = scmp.lt.s32.totalorder %s13, 2
      // Predicated region
      $region21: #{final_layer.1} parent=5 // pred_check
        %p171 = pneg %p170
      $region22: #{final_layer.1} parent=5 // pred_check_branch
        %173 = sbr.rel (%p171) target = $region24
      $region23: #{final_layer.1} parent=5 // pred_region
        // Predicated region
        $region25: #{final_layer.1} parent=23 // pred_check
          %p174 = pneg %p47
        $region26: #{final_layer.1} parent=23 // pred_check_branch
          %176 = sbr.rel (%p174) target = $region28
        $region27: #{final_layer.1} parent=23 // pred_region
          %p177 = scmp.lt.s32.totalorder %s20, 1
          %s178 = scalar_select %p177, %s20, 1
          %p179 = scmp.lt.s32.totalorder %s21, 0
          %s180 = scalar_select %p179, %s21, 0
          %s181 = sadd.s32 %s180, %s178
          %s182 = smul.addr %s181, 8
          %s183 = scalar_lea.vmem %s0, %s182
        $region28: #{final_layer.1} parent=23 // pred_fallthru
          _
        // Predicated region
        $region29: #{final_layer.1} parent=23 // pred_check
          %p184 = pneg %p73
        $region30: #{final_layer.1} parent=23 // pred_check_branch
          %186 = sbr.rel (%p184) target = $region32
        $region31: #{final_layer.1} parent=23 // pred_region
          %p187 = scmp.lt.s32.totalorder %s20, 1
          %s188 = scalar_select %p187, %s20, 1
          %s189 = smul.addr %s188, 2
          %s190 = scalar_lea.vmem %s1, %s189
        $region32: #{final_layer.1} parent=23 // pred_fallthru
          _
      $region24: #{final_layer.1} parent=5 // pred_fallthru
        _
      %p191 = scmp.le.s32.totalorder 1, %s13
      %p192 = scmp.lt.s32.totalorder %s13, 3
      %p193 = pnand %p191, %p192
      %p194 = pneg %p193
      // Predicated region
      $region33: #{final_layer.1} parent=5 // pred_check
        _
      $region34: #{final_layer.1} parent=5 // pred_check_branch
        %196 = sbr.rel (%p193) target = $region36
      $region35: #{final_layer.1} parent=5 // pred_region
        %s197 = ssub.s32 %s13, 1
        %p198 = scmp.lt.s32.totalorder %s22, 1
        %s199 = scalar_select %p198, %s22, 1
        %p200 = scmp.lt.s32.totalorder %s23, 0
        %s201 = scalar_select %p200, %s23, 0
        %s202 = sadd.s32 %s201, %s199
        %s203 = smul.addr %s202, 8
        %s204 = scalar_lea.vmem %s0, %s203
        %p205 = pneg %p53
        %p206 = pneg %p50
        %p207 = scmp.lt.s32.totalorder %s22, 1
        %s208 = scalar_select %p207, %s22, 1
        %s209 = smul.addr %s208, 2
        %s210 = scalar_lea.vmem %s1, %s209
        %p211 = pneg %p79
        %p212 = pneg %p76
        %p213 = pneg %p100
        %p214 = pneg %p97
        %p215 = pneg %p121
        %p216 = pneg %p118
        %p217 = pneg %p149
        %p218 = pneg %p146
        %s219 = sand.u32 %s136, 1
        %s220 = scalar_lea.sflag [#allocation3], %s219
        %s221 = sand.u32 %s136, 1
        %s222 = smul.addr %s221, 8
        %s223 = scalar_lea.vmem [#allocation2], %s222
        %p224 = scmp.lt.s32.totalorder %s22, 1
        %s225 = scalar_select %p224, %s22, 1
        %p226 = scmp.lt.s32.totalorder %s23, 0
        %s227 = scalar_select %p226, %s23, 0
        %s228 = sadd.s32 %s227, %s225
        %s229 = smul.addr %s228, 8
        %s230 = scalar_lea.vmem %s0, %s229
        %p231 = scmp.lt.s32.totalorder %s22, 1
        %s232 = scalar_select %p231, %s22, 1
        %s233 = smul.addr %s232, 2
        %s234 = scalar_lea.vmem %s1, %s233
        %v236 = vld [vmem:[%s230] sm:$0xff]
        %vm237 = vcmask 261120
        %v238 = vsel %vm237, %v236, 0.0
        %239 = vadd.xlane.f32.xlu0 %v238
        %v240 = vpop.xlane.xlu0 %239
        %v241 = vmul.f32 %v240, 0.03125
        %v242 = vmul.f32 %v236, %v236
        %v243 = vsel %vm237, %v242, 0.0
        %244 = vadd.xlane.f32.xlu0 %v243
        %v245 = vpop.xlane.xlu0 %244
        %v246 = vmul.f32 %v245, 0.03125
        %v247 = vmul.f32 %v241, %v241
        %v248 = vsub.f32 %v246, %v247
        %v249 = vmax.f32 %v248, 0.0
        %v250 = vadd.f32 %v249, 1e-06
        %v251 = vrsqrt.pop %v250
        %v252 = vld [vmem:[%s234] sm:$0x3]
        %v253 = vsub.f32 %v236, %v241
        %v254 = vmul.f32 %v253, %v251
        %v255 = vlaneseq
        %v256 = vshrl.u32 %v255, 7
        %v257 = vsub.s32 1, %v256
        %v258 = vrot.slane %v252, %v257
        %v259 = vmul.f32 %v254, %v258
        %v260 = vlaneseq
        %v261 = vshrl.u32 %v260, 7
        %v262 = vsub.s32 0, %v261
        %v263 = vrot.slane %v252, %v262
        %v264 = vadd.f32 %v259, %v263
        %v265 = vpack.c.bf16 %v264, %v264
        %v266 = vld [vmem:[%s2] sm:$0xf]
        %v267 = vld [vmem:[%s2 + $0x4] sm:$0xf]
        %v268 = vld [vmem:[%s2 + $0x8] sm:$0xf]
        %v269 = vld [vmem:[%s2 + $0xc] sm:$0xf]
        %v270 = vld [vmem:[%s3] sm:$0x1]
        %v272 = vlaneseq
        %v273 = vshrl.u32 %v272, 7
        %v274 = vsub.s32 0, %v273
        %v275 = vrot.slane %v270, %v274
        %v281 = vunpack.c.l.b16 %v266
        %v282 = vunpack.c.l.b16 %v267
        %v283 = vunpack.c.l.b16 %v268
        %v284 = vunpack.c.l.b16 %v269
        %v285 = vpack.c.b16 %v282, %v281
        %v286 = vpack.c.b16 %v284, %v283
        %v290 = vsel %vm237, %v265, 0
        %292 = vmatprep.subr.bf16.mxu0 0
        %293 = vmatpush1.bf16.msra.mxu0 0
        %294 = vmatprep.subr.bf16.mxu0 0
        %295 = vmatpush1.bf16.msra.mxu0 0
        %296 = vmatprep.subr.bf16.mxu0 0
        %297 = vmatpush1.bf16.msra.mxu0 0
        %298 = vmatprep.subr.bf16.mxu0 0
        %299 = vmatpush1.bf16.msra.mxu0 0
        %300 = vmatprep.subr.bf16.mxu0 0
        %301 = vmatpush1.bf16.msra.mxu0 0
        %302 = vmatprep.subr.bf16.mxu0 0
        %303 = vmatpush1.bf16.msra.mxu0 0
        %304 = vmatprep.subr.bf16.mxu0 0
        %305 = vmatpush1.bf16.msra.mxu0 %v286
        %306 = vmatprep.subr.bf16.mxu0 0
        %307 = vmatpush1.bf16.msra.mxu0 %v285
        %308 = vmatprep.subr.bf16.mxu0 0
        %309 = vmatpush2.bf16.msra.mxu0 0
        %310 = vmatprep.subr.bf16.mxu0 0
        %311 = vmatpush2.bf16.msra.mxu0 0
        %312 = vmatprep.subr.bf16.mxu0 0
        %313 = vmatpush2.bf16.msra.mxu0 0
        %314 = vmatprep.subr.bf16.mxu0 0
        %315 = vmatpush2.bf16.msra.mxu0 0
        %316 = vmatprep.subr.bf16.mxu0 0
        %317 = vmatpush2.bf16.msra.mxu0 0
        %318 = vmatprep.subr.bf16.mxu0 0
        %319 = vmatpush2.bf16.msra.mxu0 0
        %320 = vmatprep.subr.bf16.mxu0 0
        %321 = vmatpush2.bf16.msra.mxu0 0
        %322 = vmatprep.subr.bf16.mxu0 0
        %323 = vmatpush2.bf16.msra.mxu0 0
        %324 = vmatprep.mubr.bf16.mxu0 0
        %325 = vmatmul.mubr.bf16.gmra.mxu0 %v290
        %v326 = vpop.f32.mrf.mxu0
        %v327 = vadd.f32 %v275, %v326
        %v328 = vpop.f32.mrf.mxu0
        %v329 = vpop.f32.mrf.mxu0
        %v330 = vpop.f32.mrf.mxu0
        %331 = vdwg.mxu0
        %332 = vst [vmem:[%s223] sm:$0xff] %v327
        %s333 = sand.u32 %s136, 1
        %s334 = scalar_lea.sflag [#allocation3], %s333
        %s335 = sand.u32 %s136, 1
        %s336 = smul.addr %s335, 8
        %s337 = scalar_lea.vmem [#allocation2], %s336
        // Predicated region
        $region37: #{final_layer.1} parent=35 // pred_check
          %p338 = pneg %p146
        $region38: #{final_layer.1} parent=35 // pred_check_branch
          %340 = sbr.rel (%p338) target = $region40
        $region39: #{final_layer.1} parent=35 // pred_region
          %s342 = ssub.s32 128, 128
          %343 = vsyncadd %s334, %s342
          %s344 = sadd.s32 %s23, %s22
          %s345 = smul.addr %s344, 128
          %s346 = scalar_lea.hbm %s4, %s345
          %s348 = sshll.u32 %s337, 4
          %s349 = int_to_ptr.vmem [resolvable:$true] %s348
          %351 = dma.vmem_to_hbm [thread:$0]  %s349, 128, %s346, %s334
        $region40: #{final_layer.1} parent=35 // pred_fallthru
          _
      $region36: #{final_layer.1} parent=5 // pred_fallthru
        _
      %p352 = scmp.le.s32.totalorder 2, %s13
      // Predicated region
      $region41: #{final_layer.1} parent=5 // pred_check
        %p353 = pneg %p352
      $region42: #{final_layer.1} parent=5 // pred_check_branch
        %355 = sbr.rel (%p353) target = $region44
      $region43: #{final_layer.1} parent=5 // pred_region
        %s356 = ssub.s32 %s13, 2
        // Predicated region
        $region45: #{final_layer.1} parent=43 // pred_check
          %p357 = pneg %p152
        $region46: #{final_layer.1} parent=43 // pred_check_branch
          %359 = sbr.rel (%p357) target = $region48
        $region47: #{final_layer.1} parent=43 // pred_region
          %s360 = sand.u32 %s137, 1
          %s361 = scalar_lea.sflag [#allocation3], %s360
          %s362 = sand.u32 %s137, 1
          %s363 = smul.addr %s362, 8
          %s364 = scalar_lea.vmem [#allocation2], %s363
          %365 = dma.done %s361, 128
        $region48: #{final_layer.1} parent=43 // pred_fallthru
          _
      $region44: #{final_layer.1} parent=5 // pred_fallthru
        _
    $region6: #{final_layer.1} parent=1 // loop_footer
      %s17 = sadd.s32 1, %s13
    $region7: #{final_layer.1} parent=1 // loop_footer_branch
      %12 = sbr.rel target = $region3
    $region8: #{final_layer.1} parent=1 // loop_exit
      _
    %366 = vsyncpa [#allocation3], 1
    %s367 = scalar_lea.sflag [#allocation3], 1
    %368 = vsyncpa %s367, 1

</llo_original>
